<compile_context>
chip_gen: v5e
topology: v5e:2x2
jax: 0.10.0
libtpu: 0.0.40
codegen_flags: <defaults>
</compile_context>

<pallas_src>
import functools

import jax
import jax.numpy as jnp
from jax.experimental import pallas as pl
from jax.experimental.pallas import tpu as pltpu


def _embed_gather_kernel(ids_ref, tok_hbm, pos_ref, out_ref, gbuf, sems, *, nbuf):
    """Gather token-embedding rows from HBM, add position rows, store one tile.

    ids_ref : SMEM (B*S,) int32   -- scalar-prefetched token ids (flattened)
    tok_hbm : HBM  (V, D)         -- token embedding table (memory_space=ANY)
    pos_ref : VMEM (rows, D)      -- position embeddings for this tile
    out_ref : VMEM (rows, D)      -- output tile (rows = TILE_B * S)
    gbuf    : VMEM (rows, D)      -- gather landing buffer (scratch)
    sems    : DMA semaphores (nbuf,)
    """
    rows = out_ref.shape[0]            # static: TILE_B * S
    vocab = tok_hbm.shape[0]
    base = pl.program_id(0) * rows     # first flat row of this tile

    def start_row(r, slot):
        tok_id = ids_ref[base + r]
        # Clamp so an out-of-range id cannot become an OOB HBM DMA.
        tok_id = jnp.minimum(jnp.maximum(tok_id, 0), vocab - 1)
        pltpu.make_async_copy(
            tok_hbm.at[pl.ds(tok_id, 1)], gbuf.at[pl.ds(r, 1)], sems.at[slot]
        ).start()

    # Prime: up to `nbuf` row DMAs in flight.
    @pl.loop(0, min(nbuf, rows))
    def _(r):
        start_row(r, r)

    # Drain row r, then immediately reuse its semaphore slot for row r + nbuf.
    @pl.loop(0, rows)
    def _(r):
        slot = r % nbuf
        pltpu.make_async_copy(
            tok_hbm.at[pl.ds(0, 1)], gbuf.at[pl.ds(r, 1)], sems.at[slot]
        ).wait()

        @pl.when(r + nbuf < rows)
        def _():
            start_row(r + nbuf, slot)

    # All rows landed in VMEM: one vectorized add + lane/sublane-dense store.
    out_ref[...] = (gbuf[...] + pos_ref[...]).astype(out_ref.dtype)


def siglip_text_embeddings(input_ids, token_table, position_table, position_ids=None):
    """Pallas implementation of SiglipTextEmbeddings.forward (input_ids path)."""
    B, S = input_ids.shape
    V, D = token_table.shape
    dtype = token_table.dtype
    itemsize = jnp.dtype(dtype).itemsize

    # Row tiling: flatten (B, S) -> rows; aim for ~256 rows per grid step.
    tile_b = max(1, min(B, max(1, 256 // max(S, 1))))
    while B % tile_b:
        tile_b -= 1
    if tile_b != B and (tile_b * S) % 8 != 0:
        tile_b = B                      # single tile: block == full dims, always legal
    rows = tile_b * S
    grid = (B // tile_b,)
    nbuf = min(8, rows)                 # max in-flight row DMAs per tile

    ids_flat = input_ids.reshape(-1).astype(jnp.int32)       # -> SMEM via scalar prefetch

    if position_ids is None:
        # Default path: positions are arange(S); no gather, just a resident slab,
        # fetched once (constant index_map) and broadcast over the batch tile.
        pos_flat = jnp.tile(position_table[:S], (tile_b, 1))          # (rows, D)
        pos_spec = pl.BlockSpec((rows, D), lambda t, ids: (0, 0))
    else:
        # TODO(synk): explicit position_ids are gathered with an XLA take in the
        # wrapper rather than in-kernel DMA (rare path; position table is tiny).
        pos_flat = jnp.take(
            position_table, position_ids.reshape(-1).astype(jnp.int32), axis=0
        )                                                              # (B*S, D)
        pos_spec = pl.BlockSpec((rows, D), lambda t, ids: (t, 0))

    block_bytes = rows * D * itemsize
    vmem_limit = int(min(100 * 1024 * 1024, max(16 * 1024 * 1024, 8 * block_bytes)))

    cost = pl.CostEstimate(
        flops=B * S * D,                                   # the adds
        transcendentals=0,
        bytes_accessed=int(2 * B * S * D * itemsize + S * D * itemsize + B * S * 4),
    )

    out_flat = pl.pallas_call(
        functools.partial(_embed_gather_kernel, nbuf=nbuf),
        out_shape=jax.ShapeDtypeStruct((B * S, D), dtype),
        grid_spec=pltpu.PrefetchScalarGridSpec(
            num_scalar_prefetch=1,
            grid=grid,
            in_specs=[
                pl.BlockSpec(memory_space=pl.ANY),         # token table stays in HBM
                pos_spec,                                  # position rows in VMEM
            ],
            out_specs=pl.BlockSpec((rows, D), lambda t, ids: (t, 0)),
            scratch_shapes=[
                pltpu.VMEM((rows, D), dtype),              # gathered token rows
                pltpu.SemaphoreType.DMA((nbuf,)),
            ],
        ),
        compiler_params=pltpu.CompilerParams(
            dimension_semantics=("parallel",),
            vmem_limit_bytes=vmem_limit,
        ),
        cost_estimate=cost,
    )(ids_flat, token_table, pos_flat)

    return out_flat.reshape(B, S, D)


if __name__ == "__main__":
    # Small synthetic config (SiglipTextConfig analogue)
    vocab_size = 64
    max_position_embeddings = 16
    hidden_size = 32
    batch = 2
    seq_len = 8

    key = jax.random.PRNGKey(0)
    k_tok, k_pos, k_ids = jax.random.split(key, 3)

    # Deterministic parameter init (nn.Embedding weights)
    token_table = jax.random.normal(k_tok, (vocab_size, hidden_size), dtype=jnp.float32) * 0.02
    position_table = (
        jax.random.normal(k_pos, (max_position_embeddings, hidden_size), dtype=jnp.float32) * 0.02
    )
    input_ids = jax.random.randint(k_ids, (batch, seq_len), 0, vocab_size, dtype=jnp.int32)

    out = siglip_text_embeddings(input_ids, token_table, position_table)
    out = jax.block_until_ready(out)

    # Pure-JAX reference: token_embedding(input_ids) + position_embedding(arange(S))
    ref = token_table[input_ids] + position_table[jnp.arange(seq_len)][None, :, :]

    assert out.shape == (batch, seq_len, hidden_size), out.shape
    assert jnp.allclose(out, ref, atol=1e-6, rtol=1e-6), "mismatch vs reference"

    print("KERNEL_OK")
</pallas_src>

<mosaic_0001>
module attributes {stable_mosaic.version = 11 : i64} {
  func.func @_embed_gather_kernel(%arg0: i32, %arg1: memref<16xi32, #tpu.memory_space<smem>>, %arg2: memref<64x32xf32, #tpu.memory_space<any>>, %arg3: memref<16x32xf32, #tpu.memory_space<vmem>>, %arg4: memref<16x32xf32, #tpu.memory_space<vmem>>, %arg5: memref<16x32xf32, #tpu.memory_space<vmem>>, %arg6: memref<8x!tpu.dma_semaphore, #tpu.memory_space<semaphore_mem>>) attributes {dimension_semantics = [#tpu.dimension_semantics<parallel>], iteration_bounds = array<i64: 1>, scalar_prefetch = 1 : i64, scratch_operands = 2 : i64, tpu.core_type = #tpu.core_type<tc>, window_params = [{}, {pipeline_mode = #tpu.pipeline_mode<synchronous>, transform_indices = @transform_1, window_bounds = array<i64: 16, 32>}, {transform_indices = @transform_2, window_bounds = array<i64: 16, 32>}]} {
    %c16_i32 = arith.constant 16 : i32
    %0 = arith.muli %arg0, %c16_i32 : i32
    %c0_i32 = arith.constant 0 : i32
    %c8_i32 = arith.constant 8 : i32
    %1 = arith.addi %c0_i32, %c8_i32 : i32
    %c1_i32 = arith.constant 1 : i32
    scf.for %arg7 = %c0_i32 to %1 step %c1_i32  : i32 {
      %c1_i32_10 = arith.constant 1 : i32
      %7 = arith.muli %arg7, %c1_i32_10 : i32
      %c0_i32_11 = arith.constant 0 : i32
      %8 = arith.addi %c0_i32_11, %7 : i32
      %9 = arith.addi %0, %8 : i32
      %10 = arith.index_cast %9 : i32 to index
      %11 = memref.load %arg1[%10] : memref<16xi32, #tpu.memory_space<smem>>
      %c0_i32_12 = arith.constant 0 : i32
      %12 = arith.maxsi %11, %c0_i32_12 : i32
      %c63_i32 = arith.constant 63 : i32
      %13 = arith.minsi %12, %c63_i32 : i32
      %c0_i32_13 = arith.constant 0 : i32
      %14 = tpu.memref_slice %arg2[%13, %c0_i32_13] : memref<64x32xf32, #tpu.memory_space<any>> -> memref<1x32xf32, #tpu.memory_space<any>>
      %c0_i32_14 = arith.constant 0 : i32
      %15 = tpu.memref_slice %arg5[%8, %c0_i32_14] : memref<16x32xf32, #tpu.memory_space<vmem>> -> memref<1x32xf32, #tpu.memory_space<vmem>>
      %16 = tpu.memref_slice %arg6[%8] : memref<8x!tpu.dma_semaphore, #tpu.memory_space<semaphore_mem>> -> memref<1x!tpu.dma_semaphore, #tpu.memory_space<semaphore_mem>>
      %17 = tpu.memref_squeeze %16 : memref<1x!tpu.dma_semaphore, #tpu.memory_space<semaphore_mem>> -> memref<!tpu.dma_semaphore, #tpu.memory_space<semaphore_mem>>
      tpu.enqueue_dma source(%14 : memref<1x32xf32, #tpu.memory_space<any>>) target(%15 : memref<1x32xf32, #tpu.memory_space<vmem>>) target_semaphore(%17 : memref<!tpu.dma_semaphore, #tpu.memory_space<semaphore_mem>>)
    }
    %c8_i32_0 = arith.constant 8 : i32
    %c0_i32_1 = arith.constant 0 : i32
    %c16_i32_2 = arith.constant 16 : i32
    %2 = arith.addi %c0_i32_1, %c16_i32_2 : i32
    %c1_i32_3 = arith.constant 1 : i32
    scf.for %arg7 = %c0_i32_1 to %2 step %c1_i32_3  : i32 {
      %c1_i32_10 = arith.constant 1 : i32
      %7 = arith.muli %arg7, %c1_i32_10 : i32
      %c0_i32_11 = arith.constant 0 : i32
      %8 = arith.addi %c0_i32_11, %7 : i32
      %c8_i32_12 = arith.constant 8 : i32
      %c0_i32_13 = arith.constant 0 : i32
      %9 = arith.cmpi eq, %c8_i32_12, %c0_i32_13 : i32
      %c1_i32_14 = arith.constant 1 : i32
      %10 = arith.select %9, %c1_i32_14, %c8_i32_12 : i32
      %11 = arith.remsi %8, %10 : i32
      %c0_i32_15 = arith.constant 0 : i32
      %12 = arith.cmpi ne, %11, %c0_i32_15 : i32
      %c0_i32_16 = arith.constant 0 : i32
      %13 = arith.cmpi slt, %11, %c0_i32_16 : i32
      %c0_i32_17 = arith.constant 0 : i32
      %14 = arith.cmpi slt, %10, %c0_i32_17 : i32
      %15 = arith.xori %13, %14 : i1
      %16 = arith.andi %15, %12 : i1
      %17 = arith.addi %11, %10 : i32
      %18 = arith.select %16, %17, %11 : i32
      %c0_i32_18 = arith.constant 0 : i32
      %c0_i32_19 = arith.constant 0 : i32
      %19 = tpu.memref_slice %arg2[%c0_i32_18, %c0_i32_19] : memref<64x32xf32, #tpu.memory_space<any>> -> memref<1x32xf32, #tpu.memory_space<any>>
      %c0_i32_20 = arith.constant 0 : i32
      %20 = tpu.memref_slice %arg5[%8, %c0_i32_20] : memref<16x32xf32, #tpu.memory_space<vmem>> -> memref<1x32xf32, #tpu.memory_space<vmem>>
      %21 = tpu.memref_slice %arg6[%18] : memref<8x!tpu.dma_semaphore, #tpu.memory_space<semaphore_mem>> -> memref<1x!tpu.dma_semaphore, #tpu.memory_space<semaphore_mem>>
      %22 = tpu.memref_squeeze %21 : memref<1x!tpu.dma_semaphore, #tpu.memory_space<semaphore_mem>> -> memref<!tpu.dma_semaphore, #tpu.memory_space<semaphore_mem>>
      tpu.wait_dma2 semaphore(%22 : memref<!tpu.dma_semaphore, #tpu.memory_space<semaphore_mem>>) src(%19 : memref<1x32xf32, #tpu.memory_space<any>>) dst(%20 : memref<1x32xf32, #tpu.memory_space<vmem>>)
      %c8_i32_21 = arith.constant 8 : i32
      %23 = arith.addi %8, %c8_i32_21 : i32
      %c16_i32_22 = arith.constant 16 : i32
      %24 = arith.cmpi slt, %23, %c16_i32_22 : i32
      %25 = arith.extui %24 : i1 to i32
      %c0_i32_23 = arith.constant 0 : i32
      %26 = arith.cmpi ne, %25, %c0_i32_23 : i32
      scf.if %26 {
        %c8_i32_24 = arith.constant 8 : i32
        %27 = arith.addi %8, %c8_i32_24 : i32
        %28 = arith.addi %0, %27 : i32
        %29 = arith.index_cast %28 : i32 to index
        %30 = memref.load %arg1[%29] : memref<16xi32, #tpu.memory_space<smem>>
        %c0_i32_25 = arith.constant 0 : i32
        %31 = arith.maxsi %30, %c0_i32_25 : i32
        %c63_i32 = arith.constant 63 : i32
        %32 = arith.minsi %31, %c63_i32 : i32
        %c0_i32_26 = arith.constant 0 : i32
        %33 = tpu.memref_slice %arg2[%32, %c0_i32_26] : memref<64x32xf32, #tpu.memory_space<any>> -> memref<1x32xf32, #tpu.memory_space<any>>
        %c0_i32_27 = arith.constant 0 : i32
        %34 = tpu.memref_slice %arg5[%27, %c0_i32_27] : memref<16x32xf32, #tpu.memory_space<vmem>> -> memref<1x32xf32, #tpu.memory_space<vmem>>
        %35 = tpu.memref_slice %arg6[%18] : memref<8x!tpu.dma_semaphore, #tpu.memory_space<semaphore_mem>> -> memref<1x!tpu.dma_semaphore, #tpu.memory_space<semaphore_mem>>
        %36 = tpu.memref_squeeze %35 : memref<1x!tpu.dma_semaphore, #tpu.memory_space<semaphore_mem>> -> memref<!tpu.dma_semaphore, #tpu.memory_space<semaphore_mem>>
        tpu.enqueue_dma source(%33 : memref<1x32xf32, #tpu.memory_space<any>>) target(%34 : memref<1x32xf32, #tpu.memory_space<vmem>>) target_semaphore(%36 : memref<!tpu.dma_semaphore, #tpu.memory_space<semaphore_mem>>)
      } else {
      }
    }
    %c16_i32_4 = arith.constant 16 : i32
    %c0 = arith.constant 0 : index
    %c0_5 = arith.constant 0 : index
    %3 = vector.load %arg5[%c0, %c0_5] : memref<16x32xf32, #tpu.memory_space<vmem>>, vector<16x32xf32>
    %c0_6 = arith.constant 0 : index
    %c0_7 = arith.constant 0 : index
    %4 = vector.load %arg3[%c0_6, %c0_7] : memref<16x32xf32, #tpu.memory_space<vmem>>, vector<16x32xf32>
    %5 = arith.addf %3, %4 : vector<16x32xf32>
    %c0_8 = arith.constant 0 : index
    %c0_9 = arith.constant 0 : index
    %6 = vector.load %arg4[%c0_8, %c0_9] : memref<16x32xf32, #tpu.memory_space<vmem>>, vector<16x32xf32>
    tpu.vector_store %arg4[%c0_8, %c0_9], %5 {strides = array<i32>} : memref<16x32xf32, #tpu.memory_space<vmem>>, vector<16x32xf32>,
    return
  }
  func.func @transform_1(%arg0: i32, %arg1: memref<16xi32, #tpu.memory_space<smem>>) -> (i32, i32) {
    %c0_i32 = arith.constant 0 : i32
    %c0_i32_0 = arith.constant 0 : i32
    %c0_i32_1 = arith.constant 0 : i32
    return %c0_i32, %c0_i32_0 : i32, i32
  }
  func.func @transform_2(%arg0: i32, %arg1: memref<16xi32, #tpu.memory_space<smem>>) -> (i32, i32) {
    %c0_i32 = arith.constant 0 : i32
    %c0_i32_0 = arith.constant 0 : i32
    return %arg0, %c0_i32 : i32, i32
  }
}

</mosaic_0001>

<llo_original>
// kernel: tpu_custom_call.1
$region0: #{tpu_custom_call.1}
  #allocation0 [shape = 'u32[]', space=smem, size = 0x4, offset = 0x4, fixed_abs, tag = 'smem constant byte address 0x4 - core index']
  #allocation1 [shape = 'u32[72,128]{1,0:T(1,128)}', space=vmem, size = 0x9000, scoped, tag = 'internal scratch']
  #allocation2 [shape = 'f32[16,32]{1,0:T(8,128)}', space=vmem, size = 0x2000, scoped, tag = 'scratch operand']
  #allocation3 [shape = 's32[8]{0}', space=sflag, size = 0x20, scoped, tag = 'scratch operand']
  #allocation4 [shape = 's32[1]{0}', space=sflag, size = 0x4, scoped, tag = 'scoped memory for tpu_custom_call.1']
  #allocation5 [shape = 'u8[512]{0}', space=smem, size = 0x200, scoped, tag = 'prefetched SMEM operand 0']
  #allocation8 [shape = 's32[]', space=sflag, size = 0x4, offset = 0, fixed_abs, tag = 'sflag constant byte address 0x0 - dummy sync flag']
  #allocation9 [shape = 's32[]', space=sflag, size = 0x4, offset = 0, fixed_abs, tag = 'sflag constant byte address 0x0 - dummy sync flag']
  %s0 = inlined_call_operand.vmem [shape: s32[16], index: 0, kind: input, shape index: {}]
  %s1 = inlined_call_operand.vmem [shape: f32[64,32], index: 1, kind: input, shape index: {}]
  %s2 = inlined_call_operand.vmem [shape: f32[16,32], index: 2, kind: input, shape index: {}]
  %s3 = inlined_call_operand.hbm [shape: f32[16,32], index: 3, kind: output, shape index: {}]
  %s4 = sld [smem:[#allocation0]]
  $region92: #{tpu_custom_call.1} parent=0
    _
  %s6 = ssub.s32 1, %s4
  %s7 = scalar_select 0, %s6, %s4
  %s9 = sshll.u32 %s0, 4
  %s10 = int_to_ptr.vmem [resolvable:$true] %s9
  %12 = dma.vmem_to_smem %s10, 16, [#allocation5], [#allocation4]
  %14 = dma.done [#allocation4], 16
  %15 = sfence
  $region1: #{tpu_custom_call.1} parent=0
    #allocation6 [shape = 'u8[8192]{0}', space=vmem, size = 0x2000, scoped, tag = 'output window, operand 0, single buffered']
    #allocation7 [shape = 's32[1]{0}', space=sflag, size = 0x4, scoped, tag = 'scoped memory for tpu_custom_call.1']
    %16 = vsyncpa [#allocation7], 0
    // Predicated region
    $region2: #{tpu_custom_call.1} parent=1 // pred_check
      _
    $region3: #{tpu_custom_call.1} parent=1 // pred_check_branch
      %18 = sbr.rel (0) target = $region5
    $region4: #{tpu_custom_call.1} parent=1 // pred_region
      _
    $region5: #{tpu_custom_call.1} parent=1 // pred_fallthru
      _
    %s19 = smul.u32 0, 16
    loop: start=0, step=1, limit=8
    $region6: #{tpu_custom_call.1} parent=1 // loop_pre_header
      _
    $region7: #{tpu_custom_call.1} parent=1 // loop_header
      %s21 = sphi 0, %s25
      %p22 = scmp.ge.s32.totalorder %s21, 8
    $region8: #{tpu_custom_call.1} parent=1 // loop_header_branch
      %24 = sbr.rel (%p22) target = $region12
    $region9: #{tpu_custom_call.1} parent=1 // loop_body
      %s26 = sadd.s32 %s19, %s21
      %s27 = sld [smem:[#allocation5 + %s26]]
      %p28 = scmp.gt.s32.totalorder %s27, 0
      %s29 = scalar_select %p28, %s27, 0
      %p30 = scmp.lt.s32.totalorder %s29, 63
      %s31 = scalar_select %p30, %s29, 63
      %s32 = scalar_lea.vmem %s1, %s31
      %s33 = scalar_lea.vmem [#allocation2], %s21
      %s34 = scalar_lea.sflag [#allocation3], %s21
      // Predicated region
      $region13: #{tpu_custom_call.1} parent=9 // pred_check
        _
      $region14: #{tpu_custom_call.1} parent=9 // pred_check_branch
        %36 = sbr.rel target = $region16
      $region15: #{tpu_custom_call.1} parent=9 // pred_region
        // Predicated region
        $region28: #{tpu_custom_call.1} parent=15 // pred_check
          _
        $region29: #{tpu_custom_call.1} parent=15 // pred_check_branch
          %52 = sbr.rel (0) target = $region31
        $region30: #{tpu_custom_call.1} parent=15 // pred_region
          %s54 = ssub.s32 2, 1
          loop: start=0, step=1, limit=1
          $region32: #{tpu_custom_call.1} parent=30 // loop_pre_header
            _
          $region33: #{tpu_custom_call.1} parent=30 // loop_header
            %s56 = sphi 0, %s60
            %p57 = scmp.ge.s32.totalorder %s56, 1
            %s61 = sphi %s32, %s32
            %s62 = sphi %s33, %s33
          $region34: #{tpu_custom_call.1} parent=30 // loop_header_branch
            %59 = sbr.rel (%p57) target = $region38
          $region35: #{tpu_custom_call.1} parent=30 // loop_body
            %v63 = vld [vmem:[%s61] sm:%s54]
            %64 = vst [vmem:[%s62] sm:%s54] %v63
          $region36: #{tpu_custom_call.1} parent=30 // loop_footer
            %s60 = sadd.s32 1, %s56
          $region37: #{tpu_custom_call.1} parent=30 // loop_footer_branch
            %55 = sbr.rel target = $region33
          $region38: #{tpu_custom_call.1} parent=30 // loop_exit
            _
        $region31: #{tpu_custom_call.1} parent=15 // pred_fallthru
          _
      $region16: #{tpu_custom_call.1} parent=9 // pred_fallthru
        _
      // Predicated region
      $region17: #{tpu_custom_call.1} parent=9 // pred_check
        _
      $region18: #{tpu_custom_call.1} parent=9 // pred_check_branch
        %38 = sbr.rel (0) target = $region20
      $region19: #{tpu_custom_call.1} parent=9 // pred_region
        %s40 = ssub.s32 2, 1
        loop: start=0, step=1, limit=1
        $region21: #{tpu_custom_call.1} parent=19 // loop_pre_header
          _
        $region22: #{tpu_custom_call.1} parent=19 // loop_header
          %s42 = sphi 0, %s46
          %p43 = scmp.ge.s32.totalorder %s42, 1
          %s47 = sphi %s32, %s32
          %s48 = sphi %s33, %s33
        $region23: #{tpu_custom_call.1} parent=19 // loop_header_branch
          %45 = sbr.rel (%p43) target = $region27
        $region24: #{tpu_custom_call.1} parent=19 // loop_body
          %v49 = vld [vmem:[%s47] sm:%s40]
          %50 = vst [vmem:[%s48] sm:%s40] %v49
        $region25: #{tpu_custom_call.1} parent=19 // loop_footer
          %s46 = sadd.s32 1, %s42
        $region26: #{tpu_custom_call.1} parent=19 // loop_footer_branch
          %41 = sbr.rel target = $region22
        $region27: #{tpu_custom_call.1} parent=19 // loop_exit
          _
      $region20: #{tpu_custom_call.1} parent=9 // pred_fallthru
        _
      // Predicated region
      $region39: #{tpu_custom_call.1} parent=9 // pred_check
        _
      $region40: #{tpu_custom_call.1} parent=9 // pred_check_branch
        %67 = sbr.rel (0) target = $region42
      $region41: #{tpu_custom_call.1} parent=9 // pred_region
        %68 = vsyncadd %s34, 16
      $region42: #{tpu_custom_call.1} parent=9 // pred_fallthru
        _
    $region10: #{tpu_custom_call.1} parent=1 // loop_footer
      %s25 = sadd.s32 1, %s21
    $region11: #{tpu_custom_call.1} parent=1 // loop_footer_branch
      %20 = sbr.rel target = $region7
    $region12: #{tpu_custom_call.1} parent=1 // loop_exit
      _
    loop: start=0, step=1, limit=16
    $region43: #{tpu_custom_call.1} parent=1 // loop_pre_header
      _
    $region44: #{tpu_custom_call.1} parent=1 // loop_header
      %s70 = sphi 0, %s74
      %p71 = scmp.ge.s32.totalorder %s70, 16
    $region45: #{tpu_custom_call.1} parent=1 // loop_header_branch
      %73 = sbr.rel (%p71) target = $region49
    $region46: #{tpu_custom_call.1} parent=1 // loop_body
      %p75 = scmp.lt.s32.totalorder %s70, 0
      %s76 = ssub.s32 0, %s70
      %s77 = scalar_select %p75, %s76, %s70
      %s78 = sand.u32 %s77, 7
      %s79 = ssub.s32 0, %s78
      %s80 = scalar_select %p75, %s79, %s78
      %p81 = scmp.ne.s32.totalorder %s80, 0
      %p82 = scmp.lt.s32.totalorder %s80, 0
      %p83 = pnand %p82, %p81
      %p84 = pneg %p83
      %s85 = sadd.s32 %s80, 8
      %s86 = scalar_select %p84, %s85, %s80
      %s87 = scalar_lea.sflag [#allocation3], %s86
      %s88 = smul.u32 1, 1
      %s89 = sshll.u32 %s88, 4
      %90 = dma.done %s87, %s89
      %s91 = sadd.s32 %s70, 8
      %p92 = scmp.lt.s32.totalorder %s91, 16
      // Predicated region
      $region50: #{tpu_custom_call.1} parent=46 // pred_check
        %p93 = pneg %p92
      $region51: #{tpu_custom_call.1} parent=46 // pred_check_branch
        %95 = sbr.rel (%p93) target = $region53
      $region52: #{tpu_custom_call.1} parent=46 // pred_region
        %s96 = sadd.s32 %s19, %s91
        %s97 = sld [smem:[#allocation5 + %s96]]
        %p98 = scmp.gt.s32.totalorder %s97, 0
        %s99 = scalar_select %p98, %s97, 0
        %p100 = scmp.lt.s32.totalorder %s99, 63
        %s101 = scalar_select %p100, %s99, 63
        %s102 = scalar_lea.vmem %s1, %s101
        %s103 = scalar_lea.vmem [#allocation2], %s91
        // Predicated region
        $region54: #{tpu_custom_call.1} parent=52 // pred_check
          _
        $region55: #{tpu_custom_call.1} parent=52 // pred_check_branch
          %105 = sbr.rel target = $region57
        $region56: #{tpu_custom_call.1} parent=52 // pred_region
          // Predicated region
          $region69: #{tpu_custom_call.1} parent=56 // pred_check
            _
          $region70: #{tpu_custom_call.1} parent=56 // pred_check_branch
            %121 = sbr.rel (0) target = $region72
          $region71: #{tpu_custom_call.1} parent=56 // pred_region
            %s123 = ssub.s32 2, 1
            loop: start=0, step=1, limit=1
            $region73: #{tpu_custom_call.1} parent=71 // loop_pre_header
              _
            $region74: #{tpu_custom_call.1} parent=71 // loop_header
              %s125 = sphi 0, %s129
              %p126 = scmp.ge.s32.totalorder %s125, 1
              %s130 = sphi %s102, %s102
              %s131 = sphi %s103, %s103
            $region75: #{tpu_custom_call.1} parent=71 // loop_header_branch
              %128 = sbr.rel (%p126) target = $region79
            $region76: #{tpu_custom_call.1} parent=71 // loop_body
              %v132 = vld [vmem:[%s130] sm:%s123]
              %133 = vst [vmem:[%s131] sm:%s123] %v132
            $region77: #{tpu_custom_call.1} parent=71 // loop_footer
              %s129 = sadd.s32 1, %s125
            $region78: #{tpu_custom_call.1} parent=71 // loop_footer_branch
              %124 = sbr.rel target = $region74
            $region79: #{tpu_custom_call.1} parent=71 // loop_exit
              _
          $region72: #{tpu_custom_call.1} parent=56 // pred_fallthru
            _
        $region57: #{tpu_custom_call.1} parent=52 // pred_fallthru
          _
        // Predicated region
        $region58: #{tpu_custom_call.1} parent=52 // pred_check
          _
        $region59: #{tpu_custom_call.1} parent=52 // pred_check_branch
          %107 = sbr.rel (0) target = $region61
        $region60: #{tpu_custom_call.1} parent=52 // pred_region
          %s109 = ssub.s32 2, 1
          loop: start=0, step=1, limit=1
          $region62: #{tpu_custom_call.1} parent=60 // loop_pre_header
            _
          $region63: #{tpu_custom_call.1} parent=60 // loop_header
            %s111 = sphi 0, %s115
            %p112 = scmp.ge.s32.totalorder %s111, 1
            %s116 = sphi %s102, %s102
            %s117 = sphi %s103, %s103
          $region64: #{tpu_custom_call.1} parent=60 // loop_header_branch
            %114 = sbr.rel (%p112) target = $region68
          $region65: #{tpu_custom_call.1} parent=60 // loop_body
            %v118 = vld [vmem:[%s116] sm:%s109]
            %119 = vst [vmem:[%s117] sm:%s109] %v118
          $region66: #{tpu_custom_call.1} parent=60 // loop_footer
            %s115 = sadd.s32 1, %s111
          $region67: #{tpu_custom_call.1} parent=60 // loop_footer_branch
            %110 = sbr.rel target = $region63
          $region68: #{tpu_custom_call.1} parent=60 // loop_exit
            _
        $region61: #{tpu_custom_call.1} parent=52 // pred_fallthru
          _
        // Predicated region
        $region80: #{tpu_custom_call.1} parent=52 // pred_check
          _
        $region81: #{tpu_custom_call.1} parent=52 // pred_check_branch
          %136 = sbr.rel (0) target = $region83
        $region82: #{tpu_custom_call.1} parent=52 // pred_region
          %137 = vsyncadd %s87, 16
        $region83: #{tpu_custom_call.1} parent=52 // pred_fallthru
          _
      $region53: #{tpu_custom_call.1} parent=46 // pred_fallthru
        _
    $region47: #{tpu_custom_call.1} parent=1 // loop_footer
      %s74 = sadd.s32 1, %s70
    $region48: #{tpu_custom_call.1} parent=1 // loop_footer_branch
      %69 = sbr.rel target = $region44
    $region49: #{tpu_custom_call.1} parent=1 // loop_exit
      _
    %v138 = vld [vmem:[#allocation2] sm:$0xff]
    %v139 = vld [vmem:[#allocation2 + $0x8] sm:$0xff]
    %v140 = vld [vmem:[%s2] sm:$0xff]
    %v141 = vld [vmem:[%s2 + $0x8] sm:$0xff]
    %v142 = vadd.f32 %v138, %v140
    %v143 = vadd.f32 %v139, %v141
    %vm144 = vcmask 261120
    %145 = vst.msk [vmem:[#allocation6] sm:$0xff] %vm144, %v142
    %146 = vst.msk [vmem:[#allocation6 + $0x8] sm:$0xff] %vm144, %v143
    // Predicated region
    $region84: #{tpu_custom_call.1} parent=1 // pred_check
      _
    $region85: #{tpu_custom_call.1} parent=1 // pred_check_branch
      %148 = sbr.rel (0) target = $region87
    $region86: #{tpu_custom_call.1} parent=1 // pred_region
      %150 = vsyncadd [#allocation7], 0
      %s151 = sshll.u32 [#allocation6], 4
      %s152 = int_to_ptr.vmem [resolvable:$true] %s151
      %s153 = sshll.u32 %s3, 4
      %s154 = int_to_ptr.hbm [resolvable:$true] %s153
      %159 = dma.vmem_to_hbm [thread:$0]  %s152, 256, %s154, [#allocation7], 128, 128, 8
    $region87: #{tpu_custom_call.1} parent=1 // pred_fallthru
      _
    // Predicated region
    $region88: #{tpu_custom_call.1} parent=1 // pred_check
      _
    $region89: #{tpu_custom_call.1} parent=1 // pred_check_branch
      %161 = sbr.rel (0) target = $region91
    $region90: #{tpu_custom_call.1} parent=1 // pred_region
      %163 = dma.done [#allocation7], 256
    $region91: #{tpu_custom_call.1} parent=1 // pred_fallthru
      _
    %164 = vsyncpa [#allocation7], 1
  %165 = vsyncmov [#allocation3]
  %s166 = vpop.sfrf %165
  %p167 = scmp.eq.s32.totalorder %s166, 0
  %p168 = pneg %p167
  %170 = shalt.err (%p168)
  %s171 = scalar_lea.sflag [#allocation3], 1
  %172 = vsyncmov %s171
  %s173 = vpop.sfrf %172
  %p174 = scmp.eq.s32.totalorder %s173, 0
  %p175 = pneg %p174
  %177 = shalt.err (%p175)
  %s178 = scalar_lea.sflag [#allocation3], 2
  %179 = vsyncmov %s178
  %s180 = vpop.sfrf %179
  %p181 = scmp.eq.s32.totalorder %s180, 0
  %p182 = pneg %p181
  %184 = shalt.err (%p182)
  %s185 = scalar_lea.sflag [#allocation3], 3
  %186 = vsyncmov %s185
  %s187 = vpop.sfrf %186
  %p188 = scmp.eq.s32.totalorder %s187, 0
  %p189 = pneg %p188
  %191 = shalt.err (%p189)
  %s192 = scalar_lea.sflag [#allocation3], 4
  %193 = vsyncmov %s192
  %s194 = vpop.sfrf %193
  %p195 = scmp.eq.s32.totalorder %s194, 0
  %p196 = pneg %p195
  %198 = shalt.err (%p196)
  %s199 = scalar_lea.sflag [#allocation3], 5
  %200 = vsyncmov %s199
  %s201 = vpop.sfrf %200
  %p202 = scmp.eq.s32.totalorder %s201, 0
  %p203 = pneg %p202
  %205 = shalt.err (%p203)
  %s206 = scalar_lea.sflag [#allocation3], 6
  %207 = vsyncmov %s206
  %s208 = vpop.sfrf %207
  %p209 = scmp.eq.s32.totalorder %s208, 0
  %p210 = pneg %p209
  %212 = shalt.err (%p210)
  %s213 = scalar_lea.sflag [#allocation3], 7
  %214 = vsyncmov %s213
  %s215 = vpop.sfrf %214
  %p216 = scmp.eq.s32.totalorder %s215, 0
  %p217 = pneg %p216
  %219 = shalt.err (%p217)

</llo_original>
